<compile_context>
chip_gen: v7x
topology: tpu7x:2x2x1
jax: 0.10.0
libtpu: 0.0.40
codegen_flags: <defaults>
</compile_context>

<pallas_src>
import functools

import jax
import jax.numpy as jnp
from jax.experimental import pallas as pl
from jax.experimental.pallas import tpu as pltpu


def _round_up(v, m):
    return ((v + m - 1) // m) * m


def _tpu_budget():
    """(vmem_capacity_bytes, assumed TensorCores per chip) with safe fallbacks."""
    vmem_cap = 128 * 1024 * 1024
    try:
        info = pltpu.get_tpu_info()
        vmem_cap = int(getattr(info, "vmem_capacity_bytes", vmem_cap))
    except Exception:
        pass
    # v7x-class parts expose ~64 MiB VMEM per TensorCore and have 2 TCs/chip.
    num_tc = 2 if vmem_cap <= 64 * 1024 * 1024 else 1
    return vmem_cap, num_tc


def _choose_tiles(B, C, itemsize, num_tc):
    """Pick (TB, TC) satisfying the (8,128) constraint and the VMEM budget."""
    # Batch tile: <= 256 rows; on 2-TC chips guarantee >= 2 batch tiles so the
    # "parallel" grid axis can be sharded across both TensorCores.
    if num_tc >= 2 and 16 <= B <= 512:
        TB = min(256, _round_up(pl.cdiv(B, 2), 8))
    elif B <= 256:
        TB = B                               # full dim -> always layout-legal
    else:
        TB = 256
    # Class chunk: biggest tile keeping one logits block <= 8 MiB (16 MiB when
    # double-buffered).  bf16 input doubles TC at equal VMEM footprint.
    block_budget = 8 * 1024 * 1024
    hard_cap = 32768 // itemsize             # 8192 f32 / 16384 bf16 lanes
    budget_cap = max(128, (block_budget // (max(TB, 8) * itemsize)) // 128 * 128)
    tc_cap = min(hard_cap, budget_cap)
    TC = C if C <= tc_cap else tc_cap        # full dim or a 128-multiple
    return TB, TC


def _label_smoothing_kernel(x_ref, xt_ref, out_ref, m_sc, l_sc, sx_sc, *,
                            confidence, smoothing, B, C, TB, TC, mask_c, mask_b):
    i = pl.program_id(0)                     # batch tile (parallel)
    j = pl.program_id(1)                     # class chunk (innermost reduction)
    nj = pl.num_programs(1)

    # ---- init running stats at the first class chunk of each batch tile ----
    @pl.when(j == 0)
    def _():
        m_sc[...] = jnp.full_like(m_sc, -jnp.inf)
        l_sc[...] = jnp.zeros_like(l_sc)
        sx_sc[...] = jnp.zeros_like(sx_sc)

    x = x_ref[...].astype(jnp.float32)       # (TB, TC); f32 math even for bf16 input

    def accumulate(x_for_lse, x_for_sum):
        # Online logsumexp over class chunks + running sum(x) for the mean term.
        m_prev = m_sc[...]
        m_new = jnp.maximum(m_prev, jnp.max(x_for_lse, axis=-1, keepdims=True))
        alpha = jnp.exp(m_prev - m_new)                      # 0 on the first chunk
        p = jnp.exp(x_for_lse - m_new)                       # masked lanes -> 0
        l_sc[...] = alpha * l_sc[...] + jnp.sum(p, axis=-1, keepdims=True)
        m_sc[...] = m_new
        sx_sc[...] = sx_sc[...] + jnp.sum(x_for_sum, axis=-1, keepdims=True)

    if mask_c:
        last = nj - 1

        @pl.when(j < last)                   # interior chunks: zero masking work
        def _():
            accumulate(x, x)

        @pl.when(j == last)                  # only the ragged tail pays for masks
        def _():
            # Loop-invariant iota: compare a local lane index against the number
            # of valid lanes left (C - j*TC) instead of building global col ids.
            rem = C - j * TC
            lane = jax.lax.broadcasted_iota(jnp.int32, (TB, TC), 1)
            ok = lane < rem
            accumulate(jnp.where(ok, x, -jnp.inf), jnp.where(ok, x, 0.0))
    else:
        accumulate(x, x)

    # ---- finalize: loss = lse - confidence*x[target] - smoothing*mean(x) ----
    @pl.when(j == nj - 1)
    def _():
        lse = m_sc[...] + jnp.log(l_sc[...])                 # (TB, 1)
        loss_row = (lse
                    - confidence * xt_ref[...]
                    - (smoothing / C) * sx_sc[...])
        if mask_b:
            # Padded rows of a partial batch tile read unspecified memory; the
            # select discards them (NaN/Inf from the dead arm do not propagate).
            row = jax.lax.broadcasted_iota(jnp.int32, (TB, 1), 0) + i * TB
            loss_row = jnp.where(row < B, loss_row, 0.0)
        out_ref[...] = loss_row


def label_smoothing_loss(x, target, smoothing=0.1, *, tb=None, tc=None):
    """x: (B, C) logits (f32 or bf16), target: (B,) int labels -> scalar f32 loss."""
    confidence = 1.0 - smoothing
    B, C = x.shape
    itemsize = jnp.dtype(x.dtype).itemsize
    vmem_cap, num_tc = _tpu_budget()
    TB, TC = _choose_tiles(B, C, itemsize, num_tc)
    if tb is not None:
        TB = tb
    if tc is not None:
        TC = tc
    grid = (pl.cdiv(B, TB), pl.cdiv(C, TC))
    mask_c = (C % TC) != 0
    mask_b = (B % TB) != 0

    # Hoisted x[target] gather: O(B) bytes in XLA instead of a per-element
    # compare/select/reduce inside the (VALU-bound) kernel loop.
    # NOTE: assumes target values lie in [0, C), same as the original module.
    tgt = target.astype(jnp.int32)
    x_tgt = jnp.take_along_axis(x, tgt[:, None], axis=-1).astype(jnp.float32)  # (B,1)

    kernel = functools.partial(
        _label_smoothing_kernel,
        confidence=confidence, smoothing=smoothing, B=B, C=C, TB=TB, TC=TC,
        mask_c=mask_c, mask_b=mask_b)

    vmem_limit = int(min(96 * 1024 * 1024, vmem_cap * 3 // 4))  # 48 MiB on v7x

    per_row = pl.pallas_call(
        kernel,
        out_shape=jax.ShapeDtypeStruct((B, 1), jnp.float32),
        grid_spec=pltpu.PrefetchScalarGridSpec(
            num_scalar_prefetch=0,
            grid=grid,
            in_specs=[
                pl.BlockSpec((TB, TC), lambda i, j: (i, j)),       # logits tile
                pl.BlockSpec((TB, 1), lambda i, j: (i, 0)),        # x[target] rows
            ],
            out_specs=pl.BlockSpec((TB, 1), lambda i, j: (i, 0)),  # per-row loss
            scratch_shapes=[pltpu.VMEM((TB, 1), jnp.float32)] * 3,  # m, l, sum_x
        ),
        compiler_params=pltpu.CompilerParams(
            dimension_semantics=("parallel", "arbitrary"),
            vmem_limit_bytes=vmem_limit,
        ),
    )(x, x_tgt)

    # Final batch mean in JAX (per-row outputs keep the batch axis shardable).
    return jnp.mean(per_row)


def _reference(x, target, smoothing=0.1):
    confidence = 1.0 - smoothing
    logprobs = jax.nn.log_softmax(x.astype(jnp.float32), axis=-1)
    nll = -jnp.take_along_axis(logprobs, target[:, None].astype(jnp.int32), axis=-1)[:, 0]
    smooth = -jnp.mean(logprobs, axis=-1)
    return jnp.mean(confidence * nll + smoothing * smooth)


if __name__ == "__main__":
    keys = jax.random.split(jax.random.PRNGKey(0), 8)
    smoothing = 0.1

    # 1) Small single-block case (batch=8, num_classes=32), f32 logits.
    B, C = 8, 32
    x = jax.random.normal(keys[0], (B, C), dtype=jnp.float32)
    target = jax.random.randint(keys[1], (B,), 0, C, dtype=jnp.int32)
    loss = jax.block_until_ready(label_smoothing_loss(x, target, smoothing=smoothing))
    ref = _reference(x, target, smoothing)
    assert jnp.allclose(loss, ref, atol=1e-5, rtol=1e-5), (loss, ref)

    # 2) bf16 logits (halves HBM bytes; kernel math stays f32).
    xb = x.astype(jnp.bfloat16)
    loss_b = jax.block_until_ready(label_smoothing_loss(xb, target, smoothing=smoothing))
    ref_b = _reference(xb, target, smoothing)
    assert jnp.allclose(loss_b, ref_b, atol=1e-4, rtol=1e-4), (loss_b, ref_b)

    # 3) Multi-tile grid (no ragged edges): online-LSE across chunks + batch tiling.
    B2, C2 = 16, 384
    x2 = jax.random.normal(keys[2], (B2, C2), dtype=jnp.float32)
    t2 = jax.random.randint(keys[3], (B2,), 0, C2, dtype=jnp.int32)
    loss2 = jax.block_until_ready(
        label_smoothing_loss(x2, t2, smoothing=smoothing, tb=8, tc=128))
    ref2 = _reference(x2, t2, smoothing)
    assert jnp.allclose(loss2, ref2, atol=1e-5, rtol=1e-5), (loss2, ref2)

    # 4) Ragged edges: B and C not multiples of the tile (masked last chunk/rows).
    B3, C3 = 20, 200
    x3 = jax.random.normal(keys[4], (B3, C3), dtype=jnp.float32)
    t3 = jax.random.randint(keys[5], (B3,), 0, C3, dtype=jnp.int32)
    loss3 = jax.block_until_ready(
        label_smoothing_loss(x3, t3, smoothing=smoothing, tb=8, tc=128))
    ref3 = _reference(x3, t3, smoothing)
    assert jnp.allclose(loss3, ref3, atol=1e-5, rtol=1e-5), (loss3, ref3)

    # 5) Automatic tile selection (generation-aware budget, no overrides).
    B4, C4 = 48, 1000
    x4 = jax.random.normal(keys[6], (B4, C4), dtype=jnp.float32)
    t4 = jax.random.randint(keys[7], (B4,), 0, C4, dtype=jnp.int32)
    loss4 = jax.block_until_ready(label_smoothing_loss(x4, t4, smoothing=smoothing))
    ref4 = _reference(x4, t4, smoothing)
    assert jnp.allclose(loss4, ref4, atol=1e-5, rtol=1e-5), (loss4, ref4)

    print("KERNEL_OK")
</pallas_src>

<mosaic_0001>
module attributes {stable_mosaic.version = 11 : i64} {
  func.func @_label_smoothing_kernel(%arg0: i32, %arg1: i32, %arg2: memref<8x32xf32, #tpu.memory_space<vmem>>, %arg3: memref<8x1xf32, #tpu.memory_space<vmem>>, %arg4: memref<8x1xf32, #tpu.memory_space<vmem>>, %arg5: memref<8x1xf32, #tpu.memory_space<vmem>>, %arg6: memref<8x1xf32, #tpu.memory_space<vmem>>, %arg7: memref<8x1xf32, #tpu.memory_space<vmem>>) attributes {dimension_semantics = [#tpu.dimension_semantics<parallel>, #tpu.dimension_semantics<arbitrary>], iteration_bounds = array<i64: 1, 1>, scalar_prefetch = 0 : i64, scratch_operands = 3 : i64, tpu.core_type = #tpu.core_type<tc>, window_params = [{transform_indices = @transform_0, window_bounds = array<i64: 8, 32>}, {transform_indices = @transform_1, window_bounds = array<i64: 8, 1>}, {transform_indices = @transform_2, window_bounds = array<i64: 8, 1>}]} {
    %c0_i32 = arith.constant 0 : i32
    %0 = arith.cmpi eq, %arg1, %c0_i32 : i32
    %1 = arith.extui %0 : i1 to i32
    %c0_i32_0 = arith.constant 0 : i32
    %2 = arith.cmpi ne, %1, %c0_i32_0 : i32
    scf.if %2 {
      %cst_18 = arith.constant 0xFF800000 : f32
      %28 = vector.broadcast %cst_18 : f32 to vector<8x1xf32>
      %c0_19 = arith.constant 0 : index
      %c0_20 = arith.constant 0 : index
      %29 = vector.load %arg5[%c0_19, %c0_20] : memref<8x1xf32, #tpu.memory_space<vmem>>, vector<8x1xf32>
      tpu.vector_store %arg5[%c0_19, %c0_20], %28 {strides = array<i32>} : memref<8x1xf32, #tpu.memory_space<vmem>>, vector<8x1xf32>,
      %cst_21 = arith.constant 0.000000e+00 : f32
      %30 = vector.broadcast %cst_21 : f32 to vector<8x1xf32>
      %c0_22 = arith.constant 0 : index
      %c0_23 = arith.constant 0 : index
      %31 = vector.load %arg6[%c0_22, %c0_23] : memref<8x1xf32, #tpu.memory_space<vmem>>, vector<8x1xf32>
      tpu.vector_store %arg6[%c0_22, %c0_23], %30 {strides = array<i32>} : memref<8x1xf32, #tpu.memory_space<vmem>>, vector<8x1xf32>,
      %cst_24 = arith.constant 0.000000e+00 : f32
      %32 = vector.broadcast %cst_24 : f32 to vector<8x1xf32>
      %c0_25 = arith.constant 0 : index
      %c0_26 = arith.constant 0 : index
      %33 = vector.load %arg7[%c0_25, %c0_26] : memref<8x1xf32, #tpu.memory_space<vmem>>, vector<8x1xf32>
      tpu.vector_store %arg7[%c0_25, %c0_26], %32 {strides = array<i32>} : memref<8x1xf32, #tpu.memory_space<vmem>>, vector<8x1xf32>,
    } else {
    }
    %c0 = arith.constant 0 : index
    %c0_1 = arith.constant 0 : index
    %3 = vector.load %arg2[%c0, %c0_1] : memref<8x32xf32, #tpu.memory_space<vmem>>, vector<8x32xf32>
    %c0_2 = arith.constant 0 : index
    %c0_3 = arith.constant 0 : index
    %4 = vector.load %arg5[%c0_2, %c0_3] : memref<8x1xf32, #tpu.memory_space<vmem>>, vector<8x1xf32>
    %cst = arith.constant dense<0xFF800000> : vector<8xf32>
    %5 = vector.multi_reduction <maximumf>, %3, %cst [1] : vector<8x32xf32> to vector<8xf32>
    %6 = vector.shape_cast %5 : vector<8xf32> to vector<8x1xf32>
    %7 = arith.maximumf %4, %6 : vector<8x1xf32>
    %8 = arith.subf %4, %7 : vector<8x1xf32>
    %9 = math.exp %8 : vector<8x1xf32>
    %10 = vector.broadcast %7 : vector<8x1xf32> to vector<8x32xf32>
    %11 = arith.subf %3, %10 : vector<8x32xf32>
    %12 = math.exp %11 : vector<8x32xf32>
    %c0_4 = arith.constant 0 : index
    %c0_5 = arith.constant 0 : index
    %13 = vector.load %arg6[%c0_4, %c0_5] : memref<8x1xf32, #tpu.memory_space<vmem>>, vector<8x1xf32>
    %14 = arith.mulf %9, %13 : vector<8x1xf32>
    %cst_6 = arith.constant dense<0.000000e+00> : vector<8xf32>
    %15 = vector.multi_reduction <add>, %12, %cst_6 [1] : vector<8x32xf32> to vector<8xf32>
    %16 = vector.shape_cast %15 : vector<8xf32> to vector<8x1xf32>
    %17 = arith.addf %14, %16 : vector<8x1xf32>
    %c0_7 = arith.constant 0 : index
    %c0_8 = arith.constant 0 : index
    %18 = vector.load %arg6[%c0_7, %c0_8] : memref<8x1xf32, #tpu.memory_space<vmem>>, vector<8x1xf32>
    tpu.vector_store %arg6[%c0_7, %c0_8], %17 {strides = array<i32>} : memref<8x1xf32, #tpu.memory_space<vmem>>, vector<8x1xf32>,
    %c0_9 = arith.constant 0 : index
    %c0_10 = arith.constant 0 : index
    %19 = vector.load %arg5[%c0_9, %c0_10] : memref<8x1xf32, #tpu.memory_space<vmem>>, vector<8x1xf32>
    tpu.vector_store %arg5[%c0_9, %c0_10], %7 {strides = array<i32>} : memref<8x1xf32, #tpu.memory_space<vmem>>, vector<8x1xf32>,
    %c0_11 = arith.constant 0 : index
    %c0_12 = arith.constant 0 : index
    %20 = vector.load %arg7[%c0_11, %c0_12] : memref<8x1xf32, #tpu.memory_space<vmem>>, vector<8x1xf32>
    %cst_13 = arith.constant dense<0.000000e+00> : vector<8xf32>
    %21 = vector.multi_reduction <add>, %3, %cst_13 [1] : vector<8x32xf32> to vector<8xf32>
    %22 = vector.shape_cast %21 : vector<8xf32> to vector<8x1xf32>
    %23 = arith.addf %20, %22 : vector<8x1xf32>
    %c0_14 = arith.constant 0 : index
    %c0_15 = arith.constant 0 : index
    %24 = vector.load %arg7[%c0_14, %c0_15] : memref<8x1xf32, #tpu.memory_space<vmem>>, vector<8x1xf32>
    tpu.vector_store %arg7[%c0_14, %c0_15], %23 {strides = array<i32>} : memref<8x1xf32, #tpu.memory_space<vmem>>, vector<8x1xf32>,
    %c0_i32_16 = arith.constant 0 : i32
    %25 = arith.cmpi eq, %arg1, %c0_i32_16 : i32
    %26 = arith.extui %25 : i1 to i32
    %c0_i32_17 = arith.constant 0 : i32
    %27 = arith.cmpi ne, %26, %c0_i32_17 : i32
    scf.if %27 {
      %c0_18 = arith.constant 0 : index
      %c0_19 = arith.constant 0 : index
      %28 = vector.load %arg5[%c0_18, %c0_19] : memref<8x1xf32, #tpu.memory_space<vmem>>, vector<8x1xf32>
      %c0_20 = arith.constant 0 : index
      %c0_21 = arith.constant 0 : index
      %29 = vector.load %arg6[%c0_20, %c0_21] : memref<8x1xf32, #tpu.memory_space<vmem>>, vector<8x1xf32>
      %30 = math.log %29 : vector<8x1xf32>
      %31 = arith.addf %28, %30 : vector<8x1xf32>
      %c0_22 = arith.constant 0 : index
      %c0_23 = arith.constant 0 : index
      %32 = vector.load %arg3[%c0_22, %c0_23] : memref<8x1xf32, #tpu.memory_space<vmem>>, vector<8x1xf32>
      %cst_24 = arith.constant 0.899999976 : f32
      %33 = vector.broadcast %cst_24 : f32 to vector<8x1xf32>
      %34 = arith.mulf %33, %32 : vector<8x1xf32>
      %35 = arith.subf %31, %34 : vector<8x1xf32>
      %c0_25 = arith.constant 0 : index
      %c0_26 = arith.constant 0 : index
      %36 = vector.load %arg7[%c0_25, %c0_26] : memref<8x1xf32, #tpu.memory_space<vmem>>, vector<8x1xf32>
      %cst_27 = arith.constant 3.125000e-03 : f32
      %37 = vector.broadcast %cst_27 : f32 to vector<8x1xf32>
      %38 = arith.mulf %37, %36 : vector<8x1xf32>
      %39 = arith.subf %35, %38 : vector<8x1xf32>
      %c0_28 = arith.constant 0 : index
      %c0_29 = arith.constant 0 : index
      %40 = vector.load %arg4[%c0_28, %c0_29] : memref<8x1xf32, #tpu.memory_space<vmem>>, vector<8x1xf32>
      tpu.vector_store %arg4[%c0_28, %c0_29], %39 {strides = array<i32>} : memref<8x1xf32, #tpu.memory_space<vmem>>, vector<8x1xf32>,
    } else {
    }
    return
  }
  func.func @transform_0(%arg0: i32, %arg1: i32) -> (i32, i32) {
    %c0_i32 = arith.constant 0 : i32
    return %arg0, %arg1 : i32, i32
  }
  func.func @transform_1(%arg0: i32, %arg1: i32) -> (i32, i32) {
    %c0_i32 = arith.constant 0 : i32
    %c0_i32_0 = arith.constant 0 : i32
    return %arg0, %c0_i32 : i32, i32
  }
  func.func @transform_2(%arg0: i32, %arg1: i32) -> (i32, i32) {
    %c0_i32 = arith.constant 0 : i32
    %c0_i32_0 = arith.constant 0 : i32
    return %arg0, %c0_i32 : i32, i32
  }
}

</mosaic_0001>

<llo_original>
// kernel: tpu_custom_call.1
$region0: #{tpu_custom_call.1}
  #allocation0 [shape = 'u32[]', space=smem, size = 0x4, offset = 0x4, fixed_abs, tag = 'smem constant byte address 0x4 - core index']
  #allocation1 [shape = 'u32[144,128]{1,0:T(1,128)}', space=vmem, size = 0x12000, scoped, tag = 'internal scratch']
  #allocation2 [shape = 'f32[8,1]{1,0:T(8,128)}', space=vmem, size = 0x1000, scoped, tag = 'scratch operand']
  #allocation3 [shape = 'f32[8,1]{1,0:T(8,128)}', space=vmem, size = 0x1000, scoped, tag = 'scratch operand']
  #allocation4 [shape = 'f32[8,1]{1,0:T(8,128)}', space=vmem, size = 0x1000, scoped, tag = 'scratch operand']
  %s0 = inlined_call_operand.hbm [shape: f32[8,32], index: 0, kind: input, shape index: {}]
  %s1 = inlined_call_operand.hbm [shape: f32[8,1], index: 1, kind: input, shape index: {}]
  %s2 = inlined_call_operand.hbm [shape: f32[8,1], index: 2, kind: output, shape index: {}]
  %s3 = sld [smem:[#allocation0]]
  $region34: #{tpu_custom_call.1} parent=0
    _
  %s5 = ssub.s32 1, %s3
  %s6 = scalar_select 0, %s5, %s3
  $region1: #{tpu_custom_call.1} parent=0
    #allocation5 [shape = 'u8[4096]{0}', space=vmem, size = 0x1000, scoped, tag = 'input window, operand 0, single buffered']
    #allocation6 [shape = 's32[1]{0}', space=sflag, size = 0x4, scoped, tag = 'scoped memory for tpu_custom_call.1']
    #allocation7 [shape = 's32[1]{0}', space=sflag, size = 0x4, scoped, tag = 'scoped memory for tpu_custom_call.1']
    #allocation8 [shape = 'u8[4096]{0}', space=vmem, size = 0x1000, scoped, tag = 'input window, operand 1, single buffered']
    #allocation9 [shape = 's32[1]{0}', space=sflag, size = 0x4, scoped, tag = 'scoped memory for tpu_custom_call.1']
    #allocation10 [shape = 'u8[4096]{0}', space=vmem, size = 0x1000, scoped, tag = 'output window, operand 0, single buffered']
    %7 = vsyncpa [#allocation6], 0
    %8 = vsyncpa [#allocation9], 0
    %9 = vsyncpa [#allocation7], 0
    // Predicated region
    $region2: #{tpu_custom_call.1} parent=1 // pred_check
      _
    $region3: #{tpu_custom_call.1} parent=1 // pred_check_branch
      %11 = sbr.rel (0) target = $region5
    $region4: #{tpu_custom_call.1} parent=1 // pred_region
      %s13 = ssub.s32 128, 128
      %14 = vsyncadd [#allocation6], %s13
      %s16 = sshll.u32 [#allocation5], 4
      %s17 = int_to_ptr.vmem [resolvable:$true] %s16
      %19 = dma.hbm_to_vmem [thread:$0]  %s0, 128, %s17, [#allocation6]
    $region5: #{tpu_custom_call.1} parent=1 // pred_fallthru
      _
    // Predicated region
    $region6: #{tpu_custom_call.1} parent=1 // pred_check
      _
    $region7: #{tpu_custom_call.1} parent=1 // pred_check_branch
      %21 = sbr.rel (0) target = $region9
    $region8: #{tpu_custom_call.1} parent=1 // pred_region
      %s23 = ssub.s32 128, 128
      %24 = vsyncadd [#allocation9], %s23
      %s26 = sshll.u32 [#allocation8], 4
      %s27 = int_to_ptr.vmem [resolvable:$true] %s26
      %29 = dma.hbm_to_vmem [thread:$0]  %s1, 128, %s27, [#allocation9]
    $region9: #{tpu_custom_call.1} parent=1 // pred_fallthru
      _
    // Predicated region
    $region10: #{tpu_custom_call.1} parent=1 // pred_check
      _
    $region11: #{tpu_custom_call.1} parent=1 // pred_check_branch
      %31 = sbr.rel (0) target = $region13
    $region12: #{tpu_custom_call.1} parent=1 // pred_region
      %32 = dma.done [#allocation6], 128
    $region13: #{tpu_custom_call.1} parent=1 // pred_fallthru
      _
    // Predicated region
    $region14: #{tpu_custom_call.1} parent=1 // pred_check
      _
    $region15: #{tpu_custom_call.1} parent=1 // pred_check_branch
      %34 = sbr.rel (0) target = $region17
    $region16: #{tpu_custom_call.1} parent=1 // pred_region
      %35 = dma.done [#allocation9], 128
    $region17: #{tpu_custom_call.1} parent=1 // pred_fallthru
      _
    %p36 = scmp.eq.s32.totalorder 0, 0
    // Predicated region
    $region18: #{tpu_custom_call.1} parent=1 // pred_check
      %p37 = pneg %p36
    $region19: #{tpu_custom_call.1} parent=1 // pred_check_branch
      %39 = sbr.rel (%p37) target = $region21
    $region20: #{tpu_custom_call.1} parent=1 // pred_region
      %vm40 = vcmask 7168
      %41 = vst.msk [vmem:[#allocation2] sm:$0xff] %vm40, -inf
      %42 = vst.msk [vmem:[#allocation3] sm:$0xff] %vm40, 0.0
      %43 = vst.msk [vmem:[#allocation4] sm:$0xff] %vm40, 0.0
    $region21: #{tpu_custom_call.1} parent=1 // pred_fallthru
      _
    %v44 = vld [vmem:[#allocation5] sm:$0xff]
    %v45 = vld [vmem:[#allocation2] sm:$0xff]
    %vm46 = vcmask 261120
    %v47 = vsel %vm46, %v44, -inf
    %48 = vmax.xlane.f32.xlu0 %v47
    %v49 = vpop.xlane.xlu0 %48
    %v50 = vmax.f32 %v45, %v49
    %v51 = vsub.f32 %v45, %v50
    %v52 = vmul.f32 %v51, 1.442695
    %v53 = vpow.pop %v52
    %55 = vset.pattern.permute.xlu0 0
    %56 = vperm.xlu0 %55, %v50
    %v57 = vpop.permute.xlu0 %56
    %v59 = vsub.f32 %v44, %v57
    %v60 = vmul.f32 %v59, 1.442695
    %v61 = vpow.pop %v60
    %v62 = vld [vmem:[#allocation3] sm:$0xff]
    %v63 = vmul.f32 %v53, %v62
    %v64 = vsel %vm46, %v61, 0.0
    %65 = vadd.xlane.f32.xlu0 %v64
    %v66 = vpop.xlane.xlu0 %65
    %v67 = vadd.f32 %v63, %v66
    %vm68 = vcmask 7168
    %69 = vst.msk [vmem:[#allocation3] sm:$0xff] %vm68, %v67
    %70 = vst.msk [vmem:[#allocation2] sm:$0xff] %vm68, %v50
    %v71 = vld [vmem:[#allocation4] sm:$0xff]
    %v72 = vsel %vm46, %v44, 0.0
    %73 = vadd.xlane.f32.xlu0 %v72
    %v74 = vpop.xlane.xlu0 %73
    %v75 = vadd.f32 %v71, %v74
    %76 = vst.msk [vmem:[#allocation4] sm:$0xff] %vm68, %v75
    // Predicated region
    $region22: #{tpu_custom_call.1} parent=1 // pred_check
      %p77 = pneg %p36
    $region23: #{tpu_custom_call.1} parent=1 // pred_check_branch
      %79 = sbr.rel (%p77) target = $region25
    $region24: #{tpu_custom_call.1} parent=1 // pred_region
      %v80 = vld [vmem:[#allocation2] sm:$0xff]
      %v81 = vld [vmem:[#allocation3] sm:$0xff]
      %v82 = vlog2.pop %v81
      %v83 = vmul.f32 %v82, 0.6931472
      %v84 = vadd.f32 %v80, %v83
      %v85 = vld [vmem:[#allocation8] sm:$0xff]
      %v86 = vmul.f32 %v85, 0.9
      %v87 = vsub.f32 %v84, %v86
      %v88 = vld [vmem:[#allocation4] sm:$0xff]
      %v89 = vmul.f32 %v88, 0.003125
      %v90 = vsub.f32 %v87, %v89
      %91 = vst.msk [vmem:[#allocation10] sm:$0xff] %vm68, %v90
    $region25: #{tpu_custom_call.1} parent=1 // pred_fallthru
      _
    // Predicated region
    $region26: #{tpu_custom_call.1} parent=1 // pred_check
      _
    $region27: #{tpu_custom_call.1} parent=1 // pred_check_branch
      %93 = sbr.rel (0) target = $region29
    $region28: #{tpu_custom_call.1} parent=1 // pred_region
      %s95 = ssub.s32 128, 128
      %96 = vsyncadd [#allocation7], %s95
      %s98 = sshll.u32 [#allocation10], 4
      %s99 = int_to_ptr.vmem [resolvable:$true] %s98
      %101 = dma.vmem_to_hbm [thread:$0]  %s99, 128, %s2, [#allocation7]
    $region29: #{tpu_custom_call.1} parent=1 // pred_fallthru
      _
    // Predicated region
    $region30: #{tpu_custom_call.1} parent=1 // pred_check
      _
    $region31: #{tpu_custom_call.1} parent=1 // pred_check_branch
      %103 = sbr.rel (0) target = $region33
    $region32: #{tpu_custom_call.1} parent=1 // pred_region
      %104 = dma.done [#allocation7], 128
    $region33: #{tpu_custom_call.1} parent=1 // pred_fallthru
      _
    %105 = vsyncpa [#allocation6], 1
    %106 = vsyncpa [#allocation9], 1
    %107 = vsyncpa [#allocation7], 1

</llo_original>
